<compile_context>
chip_gen: v5e
topology: v5e:2x2
jax: 0.10.0
libtpu: 0.0.40
codegen_flags: <defaults>
</compile_context>

<pallas_src>
import functools

import jax
import jax.numpy as jnp
from jax.experimental import pallas as pl
from jax.experimental.pallas import tpu as pltpu


def _round_up(a, b):
    return pl.cdiv(a, b) * b


def _vmem_capacity_bytes():
    """Best-effort physical VMEM query; conservative (v7x) fallback."""
    try:
        info = pltpu.get_tpu_info()
        cap = getattr(info, "vmem_capacity_bytes", None)
        if cap:
            return int(cap)
    except Exception:
        pass
    return 64 * 1024 * 1024


def _adain_kernel(x_ref, mu_ref, sigma_ref, o_ref, *, c_true):
    # x_ref / o_ref: (tn, C) tile (full feature axis; Mosaic masks the lane
    # tail when C is not a multiple of 128).  mu_ref / sigma_ref: (tn, 1).
    x = x_ref[...].astype(jnp.float32)                       # (tn, C)

    # Single-pass statistics: the two cross-lane reductions are independent
    # (overlap on the XLUs) and one full (tn, C) elementwise pass is avoided.
    inv_c = 1.0 / c_true
    s1 = jnp.sum(x, axis=1, keepdims=True)                   # (tn, 1)
    s2 = jnp.sum(x * x, axis=1, keepdims=True)                # (tn, 1)
    mean = s1 * inv_c                                         # (tn, 1)
    # Clamp: f32 cancellation can make (s2 - s1*mean) slightly negative and
    # the 2.3e-8 eps is too small to protect rsqrt from that.
    ss = jnp.maximum(s2 - s1 * mean, 0.0)                     # (tn, 1)
    var = (ss + 2.3e-08) * inv_c                              # (tn, 1)
    inv_std = jax.lax.rsqrt(var)                              # EUP, off the VALU path

    mu_s = mu_ref[...].astype(jnp.float32)                    # (tn, 1)
    sig_s = sigma_ref[...].astype(jnp.float32)                # (tn, 1)

    # Affine fold: sigma*((x-mean)*inv_std + mu) == a*x + b with per-row a, b.
    a = sig_s * inv_std                                       # (tn, 1)
    b = sig_s * (mu_s - mean * inv_std)                       # (tn, 1)

    o_ref[...] = (a * x + b).astype(o_ref.dtype)


def adain(x, mu, sigma, *, tn=1024):
    """AdaIN forward. x: (N, C); mu, sigma: (N, 1) (or (N,)). Returns (N, C)."""
    N, C = x.shape
    if mu.ndim == 1:
        mu = mu[:, None]
    if sigma.ndim == 1:
        sigma = sigma[:, None]

    # VMEM-buffer lane padding of the feature axis (for budgeting only; the
    # BlockSpec itself uses the true C, which is legal as a full-array dim).
    C_lanes = _round_up(C, 128)

    # Generation-aware tile budget (per f32 compute tile) and scoped limit.
    vmem_cap = _vmem_capacity_bytes()
    if vmem_cap >= 96 * 1024 * 1024:          # v5e / v6e: 128 MiB physical VMEM
        tile_budget = 4 * 1024 * 1024
        vmem_limit = 64 * 1024 * 1024
    else:                                      # v7x (64 MiB per TC) / unknown
        tile_budget = 2 * 1024 * 1024
        vmem_limit = 32 * 1024 * 1024

    # Row tile: as large as possible (amortize ~0.35 us per-grid-step overhead)
    # while the f32 compute tile stays under the budget (covers the astype(f32)
    # temporaries after the a*x+b refactor).
    tn = min(tn, _round_up(N, 8))
    while tn > 8 and tn * C_lanes * 4 > tile_budget:
        tn //= 2
    tn = max(8, _round_up(tn, 8))

    # Guarantee >= 2 grid steps when N allows it, so the "parallel" grid axis
    # can shard across both v7x TensorCores (no-op on single-TC v5e/v6e).
    if N >= 16:
        tn = min(tn, max(8, _round_up(pl.cdiv(N, 2), 8)))

    grid = (pl.cdiv(N, tn),)

    kernel = functools.partial(_adain_kernel, c_true=C)

    out = pl.pallas_call(
        kernel,
        out_shape=jax.ShapeDtypeStruct((N, C), x.dtype),
        grid_spec=pltpu.PrefetchScalarGridSpec(
            num_scalar_prefetch=0,
            grid=grid,
            in_specs=[
                pl.BlockSpec((tn, C), lambda i: (i, 0)),
                pl.BlockSpec((tn, 1), lambda i: (i, 0)),
                pl.BlockSpec((tn, 1), lambda i: (i, 0)),
            ],
            out_specs=pl.BlockSpec((tn, C), lambda i: (i, 0)),
        ),
        compiler_params=pltpu.CompilerParams(
            dimension_semantics=("parallel",),
            vmem_limit_bytes=vmem_limit,
        ),
    )(x, mu, sigma)

    return out


def adain_reference(x, mu, sigma):
    """Pure-JAX mirror of the PyTorch forward (for verification)."""
    c = x.shape[1]
    x_mean = jnp.sum(x, axis=1) / c                              # (N,)
    x_std = jnp.sqrt((jnp.sum((x.T - x_mean).T ** 2, axis=1) + 2.3e-08) / c)
    x_reduce_mean = x.T - x_mean                                 # (C, N)
    x_norm = x_reduce_mean / x_std                               # (C, N)
    out = (jnp.squeeze(sigma, 1) * (x_norm + jnp.squeeze(mu, 1))).T
    return out


if __name__ == "__main__":
    key = jax.random.PRNGKey(0)
    k1, k2, k3 = jax.random.split(key, 3)

    # Small, TPU-tile-friendly shape; N=16 also exercises the >=2-step grid.
    N, C = 16, 256
    x = jax.random.normal(k1, (N, C), dtype=jnp.float32)
    mu = jax.random.normal(k2, (N, 1), dtype=jnp.float32)
    sigma = jax.random.normal(k3, (N, 1), dtype=jnp.float32) + 1.0

    out = jax.block_until_ready(adain(x, mu, sigma))
    ref = adain_reference(x, mu, sigma)
    assert out.shape == (N, C)
    assert jnp.allclose(out, ref, atol=1e-4, rtol=1e-4), "mismatch vs reference"

    # Ragged shapes (N not /8, C not /128) exercise the in-kernel tail masking
    # (no wrapper-side pad/slice anymore).
    N2, C2 = 10, 200
    x2 = jax.random.normal(k1, (N2, C2), dtype=jnp.float32)
    mu2 = jax.random.normal(k2, (N2, 1), dtype=jnp.float32)
    sigma2 = jax.random.normal(k3, (N2, 1), dtype=jnp.float32) + 1.0
    out2 = jax.block_until_ready(adain(x2, mu2, sigma2))
    ref2 = adain_reference(x2, mu2, sigma2)
    assert out2.shape == (N2, C2)
    assert jnp.allclose(out2, ref2, atol=1e-4, rtol=1e-4), "mismatch vs reference (ragged)"

    print("KERNEL_OK")
</pallas_src>

<mosaic_0001>
module attributes {stable_mosaic.version = 11 : i64} {
  func.func @_adain_kernel(%arg0: i32, %arg1: memref<8x256xf32, #tpu.memory_space<vmem>>, %arg2: memref<8x1xf32, #tpu.memory_space<vmem>>, %arg3: memref<8x1xf32, #tpu.memory_space<vmem>>, %arg4: memref<8x256xf32, #tpu.memory_space<vmem>>) attributes {dimension_semantics = [#tpu.dimension_semantics<parallel>], iteration_bounds = array<i64: 2>, scalar_prefetch = 0 : i64, scratch_operands = 0 : i64, tpu.core_type = #tpu.core_type<tc>, window_params = [{transform_indices = @transform_0, window_bounds = array<i64: 8, 256>}, {transform_indices = @transform_1, window_bounds = array<i64: 8, 1>}, {transform_indices = @transform_2, window_bounds = array<i64: 8, 1>}, {transform_indices = @transform_3, window_bounds = array<i64: 8, 256>}]} {
    %c0 = arith.constant 0 : index
    %c0_0 = arith.constant 0 : index
    %0 = vector.load %arg1[%c0, %c0_0] : memref<8x256xf32, #tpu.memory_space<vmem>>, vector<8x256xf32>
    %cst = arith.constant dense<0.000000e+00> : vector<8xf32>
    %1 = vector.multi_reduction <add>, %0, %cst [1] : vector<8x256xf32> to vector<8xf32>
    %2 = vector.shape_cast %1 : vector<8xf32> to vector<8x1xf32>
    %3 = arith.mulf %0, %0 : vector<8x256xf32>
    %cst_1 = arith.constant dense<0.000000e+00> : vector<8xf32>
    %4 = vector.multi_reduction <add>, %3, %cst_1 [1] : vector<8x256xf32> to vector<8xf32>
    %5 = vector.shape_cast %4 : vector<8xf32> to vector<8x1xf32>
    %cst_2 = arith.constant 3.906250e-03 : f32
    %6 = vector.broadcast %cst_2 : f32 to vector<8x1xf32>
    %7 = arith.mulf %2, %6 : vector<8x1xf32>
    %8 = arith.mulf %2, %7 : vector<8x1xf32>
    %9 = arith.subf %5, %8 : vector<8x1xf32>
    %cst_3 = arith.constant 0.000000e+00 : f32
    %10 = vector.broadcast %cst_3 : f32 to vector<8x1xf32>
    %11 = arith.maximumf %9, %10 : vector<8x1xf32>
    %cst_4 = arith.constant 2.300000e-08 : f32
    %12 = vector.broadcast %cst_4 : f32 to vector<8x1xf32>
    %13 = arith.addf %11, %12 : vector<8x1xf32>
    %cst_5 = arith.constant 3.906250e-03 : f32
    %14 = vector.broadcast %cst_5 : f32 to vector<8x1xf32>
    %15 = arith.mulf %13, %14 : vector<8x1xf32>
    %16 = math.rsqrt %15 : vector<8x1xf32>
    %c0_6 = arith.constant 0 : index
    %c0_7 = arith.constant 0 : index
    %17 = vector.load %arg2[%c0_6, %c0_7] : memref<8x1xf32, #tpu.memory_space<vmem>>, vector<8x1xf32>
    %c0_8 = arith.constant 0 : index
    %c0_9 = arith.constant 0 : index
    %18 = vector.load %arg3[%c0_8, %c0_9] : memref<8x1xf32, #tpu.memory_space<vmem>>, vector<8x1xf32>
    %19 = arith.mulf %18, %16 : vector<8x1xf32>
    %20 = arith.mulf %7, %16 : vector<8x1xf32>
    %21 = arith.subf %17, %20 : vector<8x1xf32>
    %22 = arith.mulf %18, %21 : vector<8x1xf32>
    %23 = vector.broadcast %19 : vector<8x1xf32> to vector<8x256xf32>
    %24 = arith.mulf %23, %0 : vector<8x256xf32>
    %25 = vector.broadcast %22 : vector<8x1xf32> to vector<8x256xf32>
    %26 = arith.addf %24, %25 : vector<8x256xf32>
    %c0_10 = arith.constant 0 : index
    %c0_11 = arith.constant 0 : index
    %27 = vector.load %arg4[%c0_10, %c0_11] : memref<8x256xf32, #tpu.memory_space<vmem>>, vector<8x256xf32>
    tpu.vector_store %arg4[%c0_10, %c0_11], %26 {strides = array<i32>} : memref<8x256xf32, #tpu.memory_space<vmem>>, vector<8x256xf32>,
    return
  }
  func.func @transform_0(%arg0: i32) -> (i32, i32) {
    %c0_i32 = arith.constant 0 : i32
    %c0_i32_0 = arith.constant 0 : i32
    return %arg0, %c0_i32 : i32, i32
  }
  func.func @transform_1(%arg0: i32) -> (i32, i32) {
    %c0_i32 = arith.constant 0 : i32
    %c0_i32_0 = arith.constant 0 : i32
    return %arg0, %c0_i32 : i32, i32
  }
  func.func @transform_2(%arg0: i32) -> (i32, i32) {
    %c0_i32 = arith.constant 0 : i32
    %c0_i32_0 = arith.constant 0 : i32
    return %arg0, %c0_i32 : i32, i32
  }
  func.func @transform_3(%arg0: i32) -> (i32, i32) {
    %c0_i32 = arith.constant 0 : i32
    %c0_i32_0 = arith.constant 0 : i32
    return %arg0, %c0_i32 : i32, i32
  }
}

</mosaic_0001>

<llo_original>
// kernel: tpu_custom_call.1
$region0: #{tpu_custom_call.1}
  #allocation0 [shape = 'u32[]', space=smem, size = 0x4, offset = 0x4, fixed_abs, tag = 'smem constant byte address 0x4 - core index']
  #allocation1 [shape = 'u32[72,128]{1,0:T(1,128)}', space=vmem, size = 0x9000, scoped, tag = 'internal scratch']
  %s0 = inlined_call_operand.vmem [shape: f32[16,256], index: 0, kind: input, shape index: {}]
  %s1 = inlined_call_operand.vmem [shape: f32[16,1], index: 1, kind: input, shape index: {}]
  %s2 = inlined_call_operand.vmem [shape: f32[16,1], index: 2, kind: input, shape index: {}]
  %s3 = inlined_call_operand.hbm [shape: f32[16,256], index: 3, kind: output, shape index: {}]
  %s4 = sld [smem:[#allocation0]]
  $region45: #{tpu_custom_call.1} parent=0
    _
  %s6 = ssub.s32 1, %s4
  %s7 = scalar_select 0, %s6, %s4
  $region1: #{tpu_custom_call.1} parent=0
    #allocation2 [shape = 'u8[16384]{0}', space=vmem, size = 0x4000, scoped, tag = 'output window, operand 0']
    #allocation3 [shape = 's32[2]{0}', space=sflag, size = 0x8, scoped, tag = 'scoped memory for tpu_custom_call.1']
    %8 = vsyncpa [#allocation3], 0
    %s9 = scalar_lea.sflag [#allocation3], 1
    %10 = vsyncpa %s9, 0
    loop: start=0, step=1, limit=4
    $region2: #{tpu_custom_call.1} parent=1 // loop_pre_header
      _
    $region3: #{tpu_custom_call.1} parent=1 // loop_header
      %s12 = sphi 0, %s16
      %p13 = scmp.ge.s32.totalorder %s12, 4
      %s22 = sphi 0, %s24
      %s25 = sphi 0, %s22
      %s26 = sphi 0, %s25
      %s42 = sphi 0, %s26
      %s48 = sphi 0, %s50
      %s51 = sphi 0, %s48
      %s52 = sphi 0, %s51
      %s68 = sphi 0, %s52
      %s74 = sphi 0, %s76
      %s77 = sphi 0, %s74
      %s78 = sphi 0, %s77
      %s94 = sphi 0, %s78
      %s100 = sphi 0, %s102
      %s103 = sphi 0, %s100
      %s104 = sphi 0, %s103
      %s120 = sphi 0, %s104
    $region4: #{tpu_custom_call.1} parent=1 // loop_header_branch
      %15 = sbr.rel (%p13) target = $region8
    $region5: #{tpu_custom_call.1} parent=1 // loop_body
      %s17 = ssub.s32 %s12, 1
      %s18 = ssub.s32 %s12, 2
      %s19 = sadd.s32 %s12, 1
      %s20 = ssub.s32 %s12, %s19
      %p21 = scmp.eq.s32.totalorder %s20, 0
      %s23 = sadd.s32 %s22, 1
      %s24 = scalar_select %p21, %s22, %s23
      %p27 = pneg %p21
      %p28 = scmp.eq.s32.totalorder %s12, 1
      %p29 = por %p27, %p28
      %p30 = scmp.ne.s32.totalorder %s22, %s25
      %p31 = scmp.eq.s32.totalorder %s12, 0
      %p32 = por %p30, %p31
      %p33 = scmp.ne.s32.totalorder %s22, %s25
      %p34 = scmp.eq.s32.totalorder %s17, 1
      %p35 = por %p33, %p34
      %p36 = scmp.ne.s32.totalorder %s25, %s26
      %p37 = scmp.eq.s32.totalorder %s17, 0
      %p38 = por %p36, %p37
      %p39 = scmp.ne.s32.totalorder %s25, %s26
      %p40 = scmp.eq.s32.totalorder %s18, 1
      %p41 = por %p39, %p40
      %p43 = scmp.ne.s32.totalorder %s26, %s42
      %p44 = scmp.eq.s32.totalorder %s18, 0
      %p45 = por %p43, %p44
      %s46 = ssub.s32 %s12, %s19
      %p47 = scmp.eq.s32.totalorder %s46, 0
      %s49 = sadd.s32 %s48, 1
      %s50 = scalar_select %p47, %s48, %s49
      %p53 = pneg %p47
      %p54 = scmp.eq.s32.totalorder %s12, 1
      %p55 = por %p53, %p54
      %p56 = scmp.ne.s32.totalorder %s48, %s51
      %p57 = scmp.eq.s32.totalorder %s12, 0
      %p58 = por %p56, %p57
      %p59 = scmp.ne.s32.totalorder %s48, %s51
      %p60 = scmp.eq.s32.totalorder %s17, 1
      %p61 = por %p59, %p60
      %p62 = scmp.ne.s32.totalorder %s51, %s52
      %p63 = scmp.eq.s32.totalorder %s17, 0
      %p64 = por %p62, %p63
      %p65 = scmp.ne.s32.totalorder %s51, %s52
      %p66 = scmp.eq.s32.totalorder %s18, 1
      %p67 = por %p65, %p66
      %p69 = scmp.ne.s32.totalorder %s52, %s68
      %p70 = scmp.eq.s32.totalorder %s18, 0
      %p71 = por %p69, %p70
      %s72 = ssub.s32 %s12, %s19
      %p73 = scmp.eq.s32.totalorder %s72, 0
      %s75 = sadd.s32 %s74, 1
      %s76 = scalar_select %p73, %s74, %s75
      %p79 = pneg %p73
      %p80 = scmp.eq.s32.totalorder %s12, 1
      %p81 = por %p79, %p80
      %p82 = scmp.ne.s32.totalorder %s74, %s77
      %p83 = scmp.eq.s32.totalorder %s12, 0
      %p84 = por %p82, %p83
      %p85 = scmp.ne.s32.totalorder %s74, %s77
      %p86 = scmp.eq.s32.totalorder %s17, 1
      %p87 = por %p85, %p86
      %p88 = scmp.ne.s32.totalorder %s77, %s78
      %p89 = scmp.eq.s32.totalorder %s17, 0
      %p90 = por %p88, %p89
      %p91 = scmp.ne.s32.totalorder %s77, %s78
      %p92 = scmp.eq.s32.totalorder %s18, 1
      %p93 = por %p91, %p92
      %p95 = scmp.ne.s32.totalorder %s78, %s94
      %p96 = scmp.eq.s32.totalorder %s18, 0
      %p97 = por %p95, %p96
      %s98 = ssub.s32 %s12, %s19
      %p99 = scmp.eq.s32.totalorder %s98, 0
      %s101 = sadd.s32 %s100, 1
      %s102 = scalar_select %p99, %s100, %s101
      %p105 = pneg %p99
      %p106 = scmp.eq.s32.totalorder %s12, 1
      %p107 = por %p105, %p106
      %p108 = scmp.ne.s32.totalorder %s100, %s103
      %p109 = scmp.eq.s32.totalorder %s12, 0
      %p110 = por %p108, %p109
      %p111 = scmp.ne.s32.totalorder %s100, %s103
      %p112 = scmp.eq.s32.totalorder %s17, 1
      %p113 = por %p111, %p112
      %p114 = scmp.ne.s32.totalorder %s103, %s104
      %p115 = scmp.eq.s32.totalorder %s17, 0
      %p116 = por %p114, %p115
      %p117 = scmp.ne.s32.totalorder %s103, %s104
      %p118 = scmp.eq.s32.totalorder %s18, 1
      %p119 = por %p117, %p118
      %p121 = scmp.ne.s32.totalorder %s104, %s120
      %p122 = scmp.eq.s32.totalorder %s18, 0
      %p123 = por %p121, %p122
      %p124 = scmp.le.s32.totalorder 1, %s12
      %p125 = scmp.lt.s32.totalorder %s12, 3
      %p126 = pnand %p124, %p125
      %p127 = pneg %p126
      // Predicated region
      $region9: #{tpu_custom_call.1} parent=5 // pred_check
        _
      $region10: #{tpu_custom_call.1} parent=5 // pred_check_branch
        %129 = sbr.rel (%p126) target = $region12
      $region11: #{tpu_custom_call.1} parent=5 // pred_region
        %s130 = ssub.s32 %s12, 1
      $region12: #{tpu_custom_call.1} parent=5 // pred_fallthru
        _
      %p131 = scmp.lt.s32.totalorder %s12, 2
      // Predicated region
      $region13: #{tpu_custom_call.1} parent=5 // pred_check
        %p132 = pneg %p131
      $region14: #{tpu_custom_call.1} parent=5 // pred_check_branch
        %134 = sbr.rel (%p132) target = $region16
      $region15: #{tpu_custom_call.1} parent=5 // pred_region
        // Predicated region
        $region17: #{tpu_custom_call.1} parent=15 // pred_check
          %p135 = pneg %p32
        $region18: #{tpu_custom_call.1} parent=15 // pred_check_branch
          %137 = sbr.rel (%p135) target = $region20
        $region19: #{tpu_custom_call.1} parent=15 // pred_region
          %p138 = scmp.lt.s32.totalorder %s12, 1
          %s139 = scalar_select %p138, %s12, 1
          %s140 = smul.addr %s139, 2
          %s141 = smul.addr %s140, 8
          %s142 = scalar_lea.vmem %s0, %s141
        $region20: #{tpu_custom_call.1} parent=15 // pred_fallthru
          _
        // Predicated region
        $region21: #{tpu_custom_call.1} parent=15 // pred_check
          %p143 = pneg %p58
        $region22: #{tpu_custom_call.1} parent=15 // pred_check_branch
          %145 = sbr.rel (%p143) target = $region24
        $region23: #{tpu_custom_call.1} parent=15 // pred_region
          %p146 = scmp.lt.s32.totalorder %s12, 1
          %s147 = scalar_select %p146, %s12, 1
          %s148 = smul.addr %s147, 8
          %s149 = scalar_lea.vmem %s1, %s148
        $region24: #{tpu_custom_call.1} parent=15 // pred_fallthru
          _
        // Predicated region
        $region25: #{tpu_custom_call.1} parent=15 // pred_check
          %p150 = pneg %p84
        $region26: #{tpu_custom_call.1} parent=15 // pred_check_branch
          %152 = sbr.rel (%p150) target = $region28
        $region27: #{tpu_custom_call.1} parent=15 // pred_region
          %p153 = scmp.lt.s32.totalorder %s12, 1
          %s154 = scalar_select %p153, %s12, 1
          %s155 = smul.addr %s154, 8
          %s156 = scalar_lea.vmem %s2, %s155
        $region28: #{tpu_custom_call.1} parent=15 // pred_fallthru
          _
      $region16: #{tpu_custom_call.1} parent=5 // pred_fallthru
        _
      %p157 = scmp.le.s32.totalorder 1, %s12
      %p158 = scmp.lt.s32.totalorder %s12, 3
      %p159 = pnand %p157, %p158
      %p160 = pneg %p159
      // Predicated region
      $region29: #{tpu_custom_call.1} parent=5 // pred_check
        _
      $region30: #{tpu_custom_call.1} parent=5 // pred_check_branch
        %162 = sbr.rel (%p159) target = $region32
      $region31: #{tpu_custom_call.1} parent=5 // pred_region
        %s163 = ssub.s32 %s12, 1
        %p164 = scmp.lt.s32.totalorder %s17, 1
        %s165 = scalar_select %p164, %s17, 1
        %s166 = smul.addr %s165, 2
        %s167 = smul.addr %s166, 8
        %s168 = scalar_lea.vmem %s0, %s167
        %p169 = pneg %p38
        %p170 = pneg %p35
        %p171 = scmp.lt.s32.totalorder %s17, 1
        %s172 = scalar_select %p171, %s17, 1
        %s173 = smul.addr %s172, 8
        %s174 = scalar_lea.vmem %s1, %s173
        %p175 = pneg %p64
        %p176 = pneg %p61
        %p177 = scmp.lt.s32.totalorder %s17, 1
        %s178 = scalar_select %p177, %s17, 1
        %s179 = smul.addr %s178, 8
        %s180 = scalar_lea.vmem %s2, %s179
        %p181 = pneg %p90
        %p182 = pneg %p87
        %p183 = pneg %p116
        %p184 = pneg %p113
        %s185 = sand.u32 %s103, 1
        %s186 = scalar_lea.sflag [#allocation3], %s185
        %s187 = sand.u32 %s103, 1
        %s188 = smul.addr %s187, 16
        %s189 = scalar_lea.vmem [#allocation2], %s188
        %p190 = scmp.lt.s32.totalorder %s17, 1
        %s191 = scalar_select %p190, %s17, 1
        %s192 = smul.addr %s191, 2
        %s193 = smul.addr %s192, 8
        %s194 = scalar_lea.vmem %s0, %s193
        %p195 = scmp.lt.s32.totalorder %s17, 1
        %s196 = scalar_select %p195, %s17, 1
        %s197 = smul.addr %s196, 8
        %s198 = scalar_lea.vmem %s1, %s197
        %p199 = scmp.lt.s32.totalorder %s17, 1
        %s200 = scalar_select %p199, %s17, 1
        %s201 = smul.addr %s200, 8
        %s202 = scalar_lea.vmem %s2, %s201
        %v203 = vld [vmem:[%s194] sm:$0xff]
        %v204 = vld [vmem:[%s194 + $0x8] sm:$0xff]
        %v205 = vadd.f32 %v203, %v204
        %206 = vadd.xlane.f32.xlu0 %v205
        %v207 = vpop.xlane.xlu0 %206
        %v208 = vmul.f32 %v203, %v203
        %v209 = vmul.f32 %v204, %v204
        %v210 = vadd.f32 %v208, %v209
        %211 = vadd.xlane.f32.xlu0 %v210
        %v212 = vpop.xlane.xlu0 %211
        %v213 = vmul.f32 %v207, 0.00390625
        %v214 = vmul.f32 %v207, %v213
        %v215 = vsub.f32 %v212, %v214
        %v216 = vmax.f32 %v215, 0.0
        %v217 = vadd.f32 %v216, 2.3e-08
        %v218 = vmul.f32 %v217, 0.00390625
        %v219 = vrsqrt.pop %v218
        %v220 = vmul.f32 %v219, %v218
        %v221 = vmul.f32 %v220, %v219
        %v222 = vmul.f32 0.5, %v221
        %v223 = vsub.f32 1.5, %v222
        %v224 = vmul.f32 %v219, %v223
        %vm225 = vweird.f32 %v218
        %vm226 = vweird.f32 %v219
        %vm227 = vmor %vm225, %vm226
        %v228 = vsel %vm227, %v219, %v224
        %v229 = vld [vmem:[%s198] sm:$0xff]
        %v230 = vld [vmem:[%s202] sm:$0xff]
        %v231 = vmul.f32 %v230, %v228
        %v232 = vmul.f32 %v213, %v228
        %v233 = vsub.f32 %v229, %v232
        %v234 = vmul.f32 %v230, %v233
        %236 = vset.pattern.permute.xlu0 0
        %237 = vperm.xlu0 %236, %v231
        %v238 = vpop.permute.xlu0 %237
        %v240 = vmul.f32 %v238, %v203
        %v241 = vmul.f32 %v238, %v204
        %243 = vset.pattern.permute.xlu0 0
        %244 = vperm.xlu0 %243, %v234
        %v245 = vpop.permute.xlu0 %244
        %v247 = vadd.f32 %v240, %v245
        %v248 = vadd.f32 %v241, %v245
        %249 = vst [vmem:[%s189] sm:$0xff] %v247
        %250 = vst [vmem:[%s189 + $0x8] sm:$0xff] %v248
        %s251 = sand.u32 %s103, 1
        %s252 = scalar_lea.sflag [#allocation3], %s251
        %s253 = sand.u32 %s103, 1
        %s254 = smul.addr %s253, 16
        %s255 = scalar_lea.vmem [#allocation2], %s254
        // Predicated region
        $region33: #{tpu_custom_call.1} parent=31 // pred_check
          %p256 = pneg %p113
        $region34: #{tpu_custom_call.1} parent=31 // pred_check_branch
          %258 = sbr.rel (%p256) target = $region36
        $region35: #{tpu_custom_call.1} parent=31 // pred_region
          %260 = vsyncadd %s252, 0
          %s261 = smul.addr %s17, 2
          %s262 = smul.addr %s261, 8
          %s263 = scalar_lea.hbm %s3, %s262
          %s265 = sshll.u32 %s255, 4
          %s266 = int_to_ptr.vmem [resolvable:$true] %s265
          %s267 = sshll.u32 %s263, 4
          %s268 = int_to_ptr.hbm [resolvable:$true] %s267
          %270 = dma.vmem_to_hbm [thread:$0]  %s266, 256, %s268, %s252
        $region36: #{tpu_custom_call.1} parent=31 // pred_fallthru
          _
      $region32: #{tpu_custom_call.1} parent=5 // pred_fallthru
        _
      %p271 = scmp.le.s32.totalorder 2, %s12
      // Predicated region
      $region37: #{tpu_custom_call.1} parent=5 // pred_check
        %p272 = pneg %p271
      $region38: #{tpu_custom_call.1} parent=5 // pred_check_branch
        %274 = sbr.rel (%p272) target = $region40
      $region39: #{tpu_custom_call.1} parent=5 // pred_region
        %s275 = ssub.s32 %s12, 2
        // Predicated region
        $region41: #{tpu_custom_call.1} parent=39 // pred_check
          %p276 = pneg %p119
        $region42: #{tpu_custom_call.1} parent=39 // pred_check_branch
          %278 = sbr.rel (%p276) target = $region44
        $region43: #{tpu_custom_call.1} parent=39 // pred_region
          %s279 = sand.u32 %s104, 1
          %s280 = scalar_lea.sflag [#allocation3], %s279
          %s281 = sand.u32 %s104, 1
          %s282 = smul.addr %s281, 16
          %s283 = scalar_lea.vmem [#allocation2], %s282
          %285 = dma.done %s280, 256
        $region44: #{tpu_custom_call.1} parent=39 // pred_fallthru
          _
      $region40: #{tpu_custom_call.1} parent=5 // pred_fallthru
        _
    $region6: #{tpu_custom_call.1} parent=1 // loop_footer
      %s16 = sadd.s32 1, %s12
    $region7: #{tpu_custom_call.1} parent=1 // loop_footer_branch
      %11 = sbr.rel target = $region3
    $region8: #{tpu_custom_call.1} parent=1 // loop_exit
      _
    %286 = vsyncpa [#allocation3], 1
    %s287 = scalar_lea.sflag [#allocation3], 1
    %288 = vsyncpa %s287, 1

</llo_original>
